<compile_context>
chip_gen: v7x
topology: tpu7x:2x2x1
jax: 0.10.0
libtpu: 0.0.40
codegen_flags: <defaults>
</compile_context>

<pallas_src>
import math

import jax
import jax.numpy as jnp
from jax import lax
from jax.experimental import pallas as pl
from jax.experimental.pallas import tpu as pltpu  # noqa: F401  (TPU backend)

# ----------------------------- config (== args) ------------------------------
NUM_FEATURES = 16          # args.num_features
NHID         = 32          # args.num_hidden
NUM_CONVS    = 2           # args.num_convs   (kernel body unrolls exactly 2)
NUM_UNCONVS  = 2           # args.num_unconvs (kernel body unrolls exactly 2)
NUM_HEADS    = 1           # args.num_heads (must be 1 for the recon bmm)
POOL_RATIO   = 0.25        # args.pooling_ratio
AVG_NODES    = 16          # args.avg_num_nodes
NUM_SEEDS    = math.ceil(POOL_RATIO * AVG_NODES)   # k = 4

# ---------------------------- packed slab layouts -----------------------------
F_PAD   = 32               # x features padded 16->32 so w1 joins the (NHID, .) weight slab
OUT_PAD = 128              # final GCN writes (N_pad, 128) -> lane-dense store; wrapper slices

# weight slab columns (all weights have NHID=32 input rows after padding w1)
C_WKV  = 0                       # 0:64    [wk * 1/sqrt(H) | wv]
C_W2   = C_WKV + 2 * NHID        # 64:96   encoder GCN 2
C_WO   = C_W2 + NHID             # 96:128  MAB fc_o
C_WLIN = C_WO + NHID             # 128:160 pools[-1] Linear
C_U1W  = C_WLIN + NHID           # 160:192 decoder GCN 1
C_U2W  = C_U1W + NHID            # 192:320 decoder GCN 2 (zero-padded to 128 out cols)
C_W1   = C_U2W + OUT_PAD         # 320:352 encoder GCN 1 (zero-padded to 32 input rows)
W_COLS = 384                     # 3 x 128 lanes

# vecs slab rows
R_BIAS = 0                       # row 0: all biases, column-matched to the weight slab
R_Q    = 8                       # rows 8:8+NUM_SEEDS, cols 0:NHID = hoisted seed query
V_ROWS = 16


# ------------------------- fused whole-forward kernel -------------------------
def _fused_forward_kernel(data_ref, wts_ref, vecs_ref, madd_ref, out_ref):
    f32, bf16 = jnp.float32, jnp.bfloat16
    H = NHID
    n_pad = data_ref.shape[0]
    bk = madd_ref.shape[0]
    num_graphs = bk // NUM_SEEDS                     # static python int at trace time

    a_hat = data_ref[:, 0:n_pad]                     # (n_pad, n_pad) bf16, D^-1/2(A+I)D^-1/2
    x     = data_ref[:, n_pad:n_pad + F_PAD]         # (n_pad, F_PAD) bf16

    def w(c0, c1):                                   # weight slice (bf16)
        return wts_ref[:, c0:c1]

    def bvec(c0, c1):                                # bias row slice (f32, broadcastable)
        return vecs_ref[R_BIAS:R_BIAS + 1, c0:c1]

    def gcn(h, wm, b, relu):
        # out = A_hat @ (h @ W) + b   (PyG GCNConv with self-loops / sym-norm)
        hw = jnp.dot(h.astype(bf16), wm, preferred_element_type=f32)
        y = jnp.dot(a_hat, hw.astype(bf16), preferred_element_type=f32) + b
        return jnp.maximum(y, 0.0) if relu else y

    # ---- encoder GCNs (num_convs = 2) ----
    h = gcn(x, w(C_W1, C_W1 + H), bvec(C_W1, C_W1 + H), True)            # (n_pad, H)
    h = gcn(h, w(C_W2, C_W2 + H), bvec(C_W2, C_W2 + H), True)            # (n_pad, H)

    # ---- PMA key/value: one packed projection (wk/bk pre-scaled by 1/sqrt(H)) ----
    kv = jnp.dot(h.astype(bf16), w(C_WKV, C_WKV + 2 * H),
                 preferred_element_type=f32) + bvec(C_WKV, C_WKV + 2 * H)  # (n_pad, 2H)
    K = kv[:, 0:H]
    V = kv[:, H:2 * H]

    # hoisted query projection Q = seed @ wq + bq (parameter-only, computed at init)
    Q = vecs_ref[R_Q:R_Q + NUM_SEEDS, 0:H]                                 # (k, H) f32

    # scores = Q @ (scaled K)^T ; stacked per-graph masked softmax over all nodes
    scores = lax.dot_general(Q.astype(bf16), K.astype(bf16),
                             (((1,), (1,)), ((), ())),
                             preferred_element_type=f32)                   # (k, n_pad)
    s = jnp.concatenate([scores] * num_graphs, axis=0) + madd_ref[...]     # (B*k, n_pad)
    s = s - jnp.max(s, axis=-1, keepdims=True)
    e = jnp.exp(s)                         # exact 0 off-graph / padding (f32 underflow)
    attn = e * pl.reciprocal(jnp.sum(e, axis=-1, keepdims=True), approx=True)

    # ---- MAB output + fc_o + pools[-1] Linear as single (B*k, H) matmuls ----
    Qst = jnp.concatenate([Q] * num_graphs, axis=0)                        # (B*k, H)
    O = Qst + jnp.dot(attn.astype(bf16), V.astype(bf16),
                      preferred_element_type=f32)                          # (B*k, H)
    O = O + jnp.maximum(
        jnp.dot(O.astype(bf16), w(C_WO, C_WO + H),
                preferred_element_type=f32) + bvec(C_WO, C_WO + H), 0.0)
    pooled = jnp.dot(O.astype(bf16), w(C_WLIN, C_WLIN + H),
                     preferred_element_type=f32) + bvec(C_WLIN, C_WLIN + H)

    # recon = bmm(attn^T, pooled) summed over graphs; off-graph attention rows are 0,
    # so one contraction over the stacked B*k axis equals the per-graph sum.
    recon = lax.dot_general(attn.astype(bf16), pooled.astype(bf16),
                            (((0,), (0,)), ((), ())),
                            preferred_element_type=f32)                    # (n_pad, H)

    # ---- decoder GCNs (ReLU except last); last weight is 128-lane padded ----
    d = gcn(recon, w(C_U1W, C_U1W + H), bvec(C_U1W, C_U1W + H), True)      # (n_pad, H)
    d = gcn(d, w(C_U2W, C_U2W + OUT_PAD), bvec(C_U2W, C_U2W + OUT_PAD), False)
    out_ref[...] = d                                                       # (n_pad, 128)


@jax.jit
def gmt_recon_forward(x, a_hat_pad, wts, vecs, madd):
    n, f = x.shape
    n_pad = a_hat_pad.shape[0]
    x_pad = jnp.zeros((n_pad, F_PAD), jnp.float32).at[:n, :f].set(x)
    data = jnp.concatenate([a_hat_pad, x_pad], axis=1).astype(jnp.bfloat16)
    out = pl.pallas_call(
        _fused_forward_kernel,
        out_shape=jax.ShapeDtypeStruct((n_pad, OUT_PAD), jnp.float32),
        # TODO(synk): for many graphs / large N (esp. v7x, 2 TCs & 64 MiB VMEM),
        # add a leading "parallel" grid axis over per-graph blocks (A_hat is
        # block-diagonal) and tile A_hat rows via BlockSpecs.
    )(data, wts, vecs, madd)
    return out[:n, :NUM_FEATURES]


# ------------------------------- params / glue --------------------------------
def init_params(key):
    keys = jax.random.split(key, 32)
    ki = iter(keys)

    def lin(kin, kout):
        s = 1.0 / math.sqrt(kin)
        wgt = jax.random.normal(next(ki), (kin, kout), jnp.float32) * s
        b = jax.random.normal(next(ki), (1, kout), jnp.float32) * 0.01
        return wgt, b

    p = {}
    p["w1"], p["b1"] = lin(NUM_FEATURES, NHID)       # encoder GCN 1
    p["w2"], p["b2"] = lin(NHID, NHID)               # encoder GCN 2
    p["seed"] = jax.random.normal(next(ki), (NUM_SEEDS, NHID), jnp.float32) / math.sqrt(NHID)
    p["wq"], p["bq"] = lin(NHID, NHID)               # PMA fc_q
    p["wk"], p["bk"] = lin(NHID, NHID)               # PMA fc_k
    p["wv"], p["bv"] = lin(NHID, NHID)               # PMA fc_v
    p["wo"], p["bo"] = lin(NHID, NHID)               # MAB fc_o
    p["wlin"], p["blin"] = lin(NHID, NHID)           # pools[-1] Linear
    p["u1w"], p["u1b"] = lin(NHID, NHID)             # decoder GCN 1
    p["u2w"], p["u2b"] = lin(NHID, NUM_FEATURES)     # decoder GCN 2
    return p


def pack_operands(p, batch, n_pad):
    """Pack all parameters (+ static graph masks) into a few lane-dense slabs."""
    H = NHID
    inv = 1.0 / math.sqrt(H)                          # fold 1/sqrt(dim_V) into wk/bk

    wts = jnp.zeros((H, W_COLS), jnp.float32)
    wts = wts.at[:, C_WKV:C_WKV + H].set(p["wk"] * inv)
    wts = wts.at[:, C_WKV + H:C_WKV + 2 * H].set(p["wv"])
    wts = wts.at[:, C_W2:C_W2 + H].set(p["w2"])
    wts = wts.at[:, C_WO:C_WO + H].set(p["wo"])
    wts = wts.at[:, C_WLIN:C_WLIN + H].set(p["wlin"])
    wts = wts.at[:, C_U1W:C_U1W + H].set(p["u1w"])
    wts = wts.at[:, C_U2W:C_U2W + NUM_FEATURES].set(p["u2w"])      # zero-pad to 128 lanes
    wts = wts.at[:NUM_FEATURES, C_W1:C_W1 + H].set(p["w1"])        # zero-pad rows 16:32
    wts = wts.astype(jnp.bfloat16)

    vecs = jnp.zeros((V_ROWS, W_COLS), jnp.float32)
    vecs = vecs.at[R_BIAS, C_WKV:C_WKV + H].set(p["bk"][0] * inv)
    vecs = vecs.at[R_BIAS, C_WKV + H:C_WKV + 2 * H].set(p["bv"][0])
    vecs = vecs.at[R_BIAS, C_W2:C_W2 + H].set(p["b2"][0])
    vecs = vecs.at[R_BIAS, C_WO:C_WO + H].set(p["bo"][0])
    vecs = vecs.at[R_BIAS, C_WLIN:C_WLIN + H].set(p["blin"][0])
    vecs = vecs.at[R_BIAS, C_U1W:C_U1W + H].set(p["u1b"][0])
    vecs = vecs.at[R_BIAS, C_U2W:C_U2W + NUM_FEATURES].set(p["u2b"][0])
    vecs = vecs.at[R_BIAS, C_W1:C_W1 + H].set(p["b1"][0])
    q_proj = p["seed"] @ p["wq"] + p["bq"]            # hoisted: parameter-only projection
    vecs = vecs.at[R_Q:R_Q + NUM_SEEDS, 0:H].set(q_proj)

    # stacked additive attention mask (B*k, n_pad): 0 on own-graph nodes, -1e9 elsewhere
    num_graphs = int(batch.max()) + 1
    n = batch.shape[0]
    member = batch[None, :] == jnp.arange(num_graphs, dtype=batch.dtype)[:, None]
    member = jnp.pad(member, ((0, 0), (0, n_pad - n)))              # pad nodes are masked
    madd = jnp.where(member, 0.0, -1e9).astype(jnp.float32)
    madd = jnp.repeat(madd, NUM_SEEDS, axis=0)                      # (B*k, n_pad)
    return wts, vecs, madd


def build_adjacency(edge_index, n, n_pad):
    # D^-1/2 (A + I) D^-1/2 — precomputed once (static graph), zero-padded to n_pad.
    src, dst = edge_index[0], edge_index[1]
    A = jnp.zeros((n, n), jnp.float32)
    A = A.at[src, dst].set(1.0).at[dst, src].set(1.0)
    A = A + jnp.eye(n, dtype=jnp.float32)
    dinv = 1.0 / jnp.sqrt(jnp.sum(A, axis=1))
    A = A * dinv[:, None] * dinv[None, :]
    return jnp.zeros((n_pad, n_pad), jnp.float32).at[:n, :n].set(A)


# ------------------------------ pure-JAX reference -----------------------------
def _ref_forward(x, a_hat, batch, pos, num_graphs, n_max, p):
    h = jax.nn.relu(a_hat @ (x @ p["w1"]) + p["b1"])
    h = jax.nn.relu(a_hat @ (h @ p["w2"]) + p["b2"])
    H = h.shape[1]
    dense = jnp.zeros((num_graphs, n_max, H), jnp.float32).at[batch, pos].set(h)
    mask = jnp.zeros((num_graphs, n_max), jnp.float32).at[batch, pos].set(1.0)
    neg = (1.0 - mask) * -1e9
    Q = p["seed"] @ p["wq"] + p["bq"]
    K = dense @ p["wk"] + p["bk"]
    V = dense @ p["wv"] + p["bv"]
    score = jnp.einsum("kh,bnh->bkn", Q, K) / math.sqrt(H) + neg[:, None, :]
    A = jax.nn.softmax(score, axis=-1)
    O = Q[None] + jnp.einsum("bkn,bnh->bkh", A, V)
    O = O + jax.nn.relu(O @ p["wo"] + p["bo"])
    pooled = O @ p["wlin"] + p["blin"]
    recon = jnp.einsum("bkn,bkh->bnh", A, pooled)[batch, pos]
    d = jax.nn.relu(a_hat @ (recon @ p["u1w"]) + p["u1b"])
    return a_hat @ (d @ p["u2w"]) + p["u2b"]


# ----------------------------------- main -------------------------------------
if __name__ == "__main__":
    key = jax.random.PRNGKey(0)
    k_feat, k_param = jax.random.split(key)

    # two graphs: graph 0 = 8-node chain, graph 1 = 6-node chain
    sizes = [8, 6]
    N = sum(sizes)                       # 14 nodes total
    N_PAD = ((N + 7) // 8) * 8           # 16 (sublane multiple)
    NMAX = max(sizes)
    B = len(sizes)

    batch = jnp.array(sum(([g] * s for g, s in enumerate(sizes)), []), jnp.int32)
    pos = jnp.array(sum((list(range(s)) for s in sizes), []), jnp.int32)

    src, dst = [], []
    off = 0
    for s in sizes:
        for i in range(s - 1):
            src.append(off + i)
            dst.append(off + i + 1)
        off += s
    edge_index = jnp.array([src, dst], jnp.int32)

    x = jax.random.normal(k_feat, (N, NUM_FEATURES), jnp.float32)
    params = init_params(k_param)

    # hoisted static-graph / parameter preprocessing (done once, outside the forward)
    a_hat_pad = build_adjacency(edge_index, N, N_PAD)
    wts, vecs, madd = pack_operands(params, batch, N_PAD)

    out = gmt_recon_forward(x, a_hat_pad, wts, vecs, madd)
    out = jax.block_until_ready(out)
    assert out.shape == (N, NUM_FEATURES), out.shape
    assert bool(jnp.all(jnp.isfinite(out)))

    # Numerical check vs a dense-batch (PyTorch-style) pure-JAX f32 reference.
    # Kernel uses bf16 MXU inputs (f32 accumulation) + approx reciprocal,
    # so compare at ~bf16 fidelity.
    with jax.default_matmul_precision("highest"):
        ref = _ref_forward(x, a_hat_pad[:N, :N], batch, pos, B, NMAX, params)
    assert bool(jnp.allclose(out, ref, rtol=3e-2, atol=3e-2)), \
        float(jnp.max(jnp.abs(out - ref)))

    print("KERNEL_OK")
</pallas_src>

<mosaic_0001>
module attributes {stable_mosaic.version = 11 : i64} {
  func.func @_fused_forward_kernel(%arg0: memref<16x48xbf16, #tpu.memory_space<vmem>>, %arg1: memref<32x384xbf16, #tpu.memory_space<vmem>>, %arg2: memref<16x384xf32, #tpu.memory_space<vmem>>, %arg3: memref<8x16xf32, #tpu.memory_space<vmem>>, %arg4: memref<16x128xf32, #tpu.memory_space<vmem>>) attributes {dimension_semantics = [], scalar_prefetch = 0 : i64, scratch_operands = 0 : i64, tpu.core_type = #tpu.core_type<tc>} {
    %c0 = arith.constant 0 : index
    %c0_0 = arith.constant 0 : index
    %0 = vector.load %arg0[%c0, %c0_0] : memref<16x48xbf16, #tpu.memory_space<vmem>>, vector<16x16xbf16>
    %c0_1 = arith.constant 0 : index
    %c16 = arith.constant 16 : index
    %1 = vector.load %arg0[%c0_1, %c16] : memref<16x48xbf16, #tpu.memory_space<vmem>>, vector<16x32xbf16>
    %c0_2 = arith.constant 0 : index
    %c320 = arith.constant 320 : index
    %2 = vector.load %arg1[%c0_2, %c320] : memref<32x384xbf16, #tpu.memory_space<vmem>>, vector<32x32xbf16>
    %c0_3 = arith.constant 0 : index
    %c320_4 = arith.constant 320 : index
    %3 = vector.load %arg2[%c0_3, %c320_4] : memref<16x384xf32, #tpu.memory_space<vmem>>, vector<1x32xf32>
    %cst = arith.constant dense<0.000000e+00> : vector<16x32xf32>
    %4 = tpu.matmul %1, %2, %cst {dimension_numbers = #tpu.dot_dimension_numbers<[1], [0], [0], [1], [0, 0, 1, 1], [], []>} : vector<16x32xbf16>, vector<32x32xbf16>, vector<16x32xf32> -> vector<16x32xf32>
    %5 = arith.truncf %4 : vector<16x32xf32> to vector<16x32xbf16>
    %cst_5 = arith.constant dense<0.000000e+00> : vector<16x32xf32>
    %6 = tpu.matmul %0, %5, %cst_5 {dimension_numbers = #tpu.dot_dimension_numbers<[1], [0], [0], [1], [0, 0, 1, 1], [], []>} : vector<16x16xbf16>, vector<16x32xbf16>, vector<16x32xf32> -> vector<16x32xf32>
    %7 = vector.broadcast %3 : vector<1x32xf32> to vector<16x32xf32>
    %8 = arith.addf %6, %7 : vector<16x32xf32>
    %cst_6 = arith.constant 0.000000e+00 : f32
    %9 = vector.broadcast %cst_6 : f32 to vector<16x32xf32>
    %10 = arith.maximumf %8, %9 : vector<16x32xf32>
    %c0_7 = arith.constant 0 : index
    %c64 = arith.constant 64 : index
    %11 = vector.load %arg1[%c0_7, %c64] : memref<32x384xbf16, #tpu.memory_space<vmem>>, vector<32x32xbf16>
    %c0_8 = arith.constant 0 : index
    %c64_9 = arith.constant 64 : index
    %12 = vector.load %arg2[%c0_8, %c64_9] : memref<16x384xf32, #tpu.memory_space<vmem>>, vector<1x32xf32>
    %13 = arith.truncf %10 : vector<16x32xf32> to vector<16x32xbf16>
    %cst_10 = arith.constant dense<0.000000e+00> : vector<16x32xf32>
    %14 = tpu.matmul %13, %11, %cst_10 {dimension_numbers = #tpu.dot_dimension_numbers<[1], [0], [0], [1], [0, 0, 1, 1], [], []>} : vector<16x32xbf16>, vector<32x32xbf16>, vector<16x32xf32> -> vector<16x32xf32>
    %15 = arith.truncf %14 : vector<16x32xf32> to vector<16x32xbf16>
    %cst_11 = arith.constant dense<0.000000e+00> : vector<16x32xf32>
    %16 = tpu.matmul %0, %15, %cst_11 {dimension_numbers = #tpu.dot_dimension_numbers<[1], [0], [0], [1], [0, 0, 1, 1], [], []>} : vector<16x16xbf16>, vector<16x32xbf16>, vector<16x32xf32> -> vector<16x32xf32>
    %17 = vector.broadcast %12 : vector<1x32xf32> to vector<16x32xf32>
    %18 = arith.addf %16, %17 : vector<16x32xf32>
    %cst_12 = arith.constant 0.000000e+00 : f32
    %19 = vector.broadcast %cst_12 : f32 to vector<16x32xf32>
    %20 = arith.maximumf %18, %19 : vector<16x32xf32>
    %21 = arith.truncf %20 : vector<16x32xf32> to vector<16x32xbf16>
    %c0_13 = arith.constant 0 : index
    %c0_14 = arith.constant 0 : index
    %22 = vector.load %arg1[%c0_13, %c0_14] : memref<32x384xbf16, #tpu.memory_space<vmem>>, vector<32x64xbf16>
    %cst_15 = arith.constant dense<0.000000e+00> : vector<16x64xf32>
    %23 = tpu.matmul %21, %22, %cst_15 {dimension_numbers = #tpu.dot_dimension_numbers<[1], [0], [0], [1], [0, 0, 1, 1], [], []>} : vector<16x32xbf16>, vector<32x64xbf16>, vector<16x64xf32> -> vector<16x64xf32>
    %c0_16 = arith.constant 0 : index
    %c0_17 = arith.constant 0 : index
    %24 = vector.load %arg2[%c0_16, %c0_17] : memref<16x384xf32, #tpu.memory_space<vmem>>, vector<1x64xf32>
    %25 = vector.broadcast %24 : vector<1x64xf32> to vector<16x64xf32>
    %26 = arith.addf %23, %25 : vector<16x64xf32>
    %27 = vector.extract_strided_slice %26 {offsets = [0, 0], sizes = [16, 32], strides = [1, 1]} : vector<16x64xf32> to vector<16x32xf32>
    %28 = vector.extract_strided_slice %26 {offsets = [0, 32], sizes = [16, 32], strides = [1, 1]} : vector<16x64xf32> to vector<16x32xf32>
    %c8 = arith.constant 8 : index
    %c0_18 = arith.constant 0 : index
    %29 = vector.load %arg2[%c8, %c0_18] : memref<16x384xf32, #tpu.memory_space<vmem>>, vector<4x32xf32>
    %30 = arith.truncf %29 : vector<4x32xf32> to vector<4x32xbf16>
    %31 = arith.truncf %27 : vector<16x32xf32> to vector<16x32xbf16>
    %cst_19 = arith.constant dense<0.000000e+00> : vector<4x16xf32>
    %32 = tpu.matmul %30, %31, %cst_19 {dimension_numbers = #tpu.dot_dimension_numbers<[1], [1], [0], [0], [0, 0, 1, 0], [], []>} : vector<4x32xbf16>, vector<16x32xbf16>, vector<4x16xf32> -> vector<4x16xf32>
    %33 = tpu.concatenate %32, %32 in 0 : vector<4x16xf32>, vector<4x16xf32> -> vector<8x16xf32>
    %c0_20 = arith.constant 0 : index
    %c0_21 = arith.constant 0 : index
    %34 = vector.load %arg3[%c0_20, %c0_21] : memref<8x16xf32, #tpu.memory_space<vmem>>, vector<8x16xf32>
    %35 = arith.addf %33, %34 : vector<8x16xf32>
    %cst_22 = arith.constant dense<0xFF800000> : vector<8xf32>
    %36 = vector.multi_reduction <maximumf>, %35, %cst_22 [1] : vector<8x16xf32> to vector<8xf32>
    %37 = vector.shape_cast %36 : vector<8xf32> to vector<8x1xf32>
    %38 = vector.broadcast %37 : vector<8x1xf32> to vector<8x16xf32>
    %39 = arith.subf %35, %38 : vector<8x16xf32>
    %40 = math.exp %39 : vector<8x16xf32>
    %cst_23 = arith.constant dense<0.000000e+00> : vector<8xf32>
    %41 = vector.multi_reduction <add>, %40, %cst_23 [1] : vector<8x16xf32> to vector<8xf32>
    %42 = vector.shape_cast %41 : vector<8xf32> to vector<8x1xf32>
    %43 = tpu.reciprocal %42 {approx = true} : vector<8x1xf32> -> vector<8x1xf32>
    %44 = vector.broadcast %43 : vector<8x1xf32> to vector<8x16xf32>
    %45 = arith.mulf %40, %44 : vector<8x16xf32>
    %46 = tpu.concatenate %29, %29 in 0 : vector<4x32xf32>, vector<4x32xf32> -> vector<8x32xf32>
    %47 = arith.truncf %45 : vector<8x16xf32> to vector<8x16xbf16>
    %48 = arith.truncf %28 : vector<16x32xf32> to vector<16x32xbf16>
    %cst_24 = arith.constant dense<0.000000e+00> : vector<8x32xf32>
    %49 = tpu.matmul %47, %48, %cst_24 {dimension_numbers = #tpu.dot_dimension_numbers<[1], [0], [0], [1], [0, 0, 1, 1], [], []>} : vector<8x16xbf16>, vector<16x32xbf16>, vector<8x32xf32> -> vector<8x32xf32>
    %50 = arith.addf %46, %49 : vector<8x32xf32>
    %51 = arith.truncf %50 : vector<8x32xf32> to vector<8x32xbf16>
    %c0_25 = arith.constant 0 : index
    %c96 = arith.constant 96 : index
    %52 = vector.load %arg1[%c0_25, %c96] : memref<32x384xbf16, #tpu.memory_space<vmem>>, vector<32x32xbf16>
    %cst_26 = arith.constant dense<0.000000e+00> : vector<8x32xf32>
    %53 = tpu.matmul %51, %52, %cst_26 {dimension_numbers = #tpu.dot_dimension_numbers<[1], [0], [0], [1], [0, 0, 1, 1], [], []>} : vector<8x32xbf16>, vector<32x32xbf16>, vector<8x32xf32> -> vector<8x32xf32>
    %c0_27 = arith.constant 0 : index
    %c96_28 = arith.constant 96 : index
    %54 = vector.load %arg2[%c0_27, %c96_28] : memref<16x384xf32, #tpu.memory_space<vmem>>, vector<1x32xf32>
    %55 = vector.broadcast %54 : vector<1x32xf32> to vector<8x32xf32>
    %56 = arith.addf %53, %55 : vector<8x32xf32>
    %cst_29 = arith.constant 0.000000e+00 : f32
    %57 = vector.broadcast %cst_29 : f32 to vector<8x32xf32>
    %58 = arith.maximumf %56, %57 : vector<8x32xf32>
    %59 = arith.addf %50, %58 : vector<8x32xf32>
    %60 = arith.truncf %59 : vector<8x32xf32> to vector<8x32xbf16>
    %c0_30 = arith.constant 0 : index
    %c128 = arith.constant 128 : index
    %61 = vector.load %arg1[%c0_30, %c128] : memref<32x384xbf16, #tpu.memory_space<vmem>>, vector<32x32xbf16>
    %cst_31 = arith.constant dense<0.000000e+00> : vector<8x32xf32>
    %62 = tpu.matmul %60, %61, %cst_31 {dimension_numbers = #tpu.dot_dimension_numbers<[1], [0], [0], [1], [0, 0, 1, 1], [], []>} : vector<8x32xbf16>, vector<32x32xbf16>, vector<8x32xf32> -> vector<8x32xf32>
    %c0_32 = arith.constant 0 : index
    %c128_33 = arith.constant 128 : index
    %63 = vector.load %arg2[%c0_32, %c128_33] : memref<16x384xf32, #tpu.memory_space<vmem>>, vector<1x32xf32>
    %64 = vector.broadcast %63 : vector<1x32xf32> to vector<8x32xf32>
    %65 = arith.addf %62, %64 : vector<8x32xf32>
    %66 = arith.truncf %45 : vector<8x16xf32> to vector<8x16xbf16>
    %67 = arith.truncf %65 : vector<8x32xf32> to vector<8x32xbf16>
    %cst_34 = arith.constant dense<0.000000e+00> : vector<16x32xf32>
    %68 = tpu.matmul %66, %67, %cst_34 {dimension_numbers = #tpu.dot_dimension_numbers<[0], [0], [1], [1], [0, 1, 1, 1], [], []>} : vector<8x16xbf16>, vector<8x32xbf16>, vector<16x32xf32> -> vector<16x32xf32>
    %c0_35 = arith.constant 0 : index
    %c160 = arith.constant 160 : index
    %69 = vector.load %arg1[%c0_35, %c160] : memref<32x384xbf16, #tpu.memory_space<vmem>>, vector<32x32xbf16>
    %c0_36 = arith.constant 0 : index
    %c160_37 = arith.constant 160 : index
    %70 = vector.load %arg2[%c0_36, %c160_37] : memref<16x384xf32, #tpu.memory_space<vmem>>, vector<1x32xf32>
    %71 = arith.truncf %68 : vector<16x32xf32> to vector<16x32xbf16>
    %cst_38 = arith.constant dense<0.000000e+00> : vector<16x32xf32>
    %72 = tpu.matmul %71, %69, %cst_38 {dimension_numbers = #tpu.dot_dimension_numbers<[1], [0], [0], [1], [0, 0, 1, 1], [], []>} : vector<16x32xbf16>, vector<32x32xbf16>, vector<16x32xf32> -> vector<16x32xf32>
    %73 = arith.truncf %72 : vector<16x32xf32> to vector<16x32xbf16>
    %cst_39 = arith.constant dense<0.000000e+00> : vector<16x32xf32>
    %74 = tpu.matmul %0, %73, %cst_39 {dimension_numbers = #tpu.dot_dimension_numbers<[1], [0], [0], [1], [0, 0, 1, 1], [], []>} : vector<16x16xbf16>, vector<16x32xbf16>, vector<16x32xf32> -> vector<16x32xf32>
    %75 = vector.broadcast %70 : vector<1x32xf32> to vector<16x32xf32>
    %76 = arith.addf %74, %75 : vector<16x32xf32>
    %cst_40 = arith.constant 0.000000e+00 : f32
    %77 = vector.broadcast %cst_40 : f32 to vector<16x32xf32>
    %78 = arith.maximumf %76, %77 : vector<16x32xf32>
    %c0_41 = arith.constant 0 : index
    %c192 = arith.constant 192 : index
    %79 = vector.load %arg1[%c0_41, %c192] : memref<32x384xbf16, #tpu.memory_space<vmem>>, vector<32x128xbf16>
    %c0_42 = arith.constant 0 : index
    %c192_43 = arith.constant 192 : index
    %80 = vector.load %arg2[%c0_42, %c192_43] : memref<16x384xf32, #tpu.memory_space<vmem>>, vector<1x128xf32>
    %81 = arith.truncf %78 : vector<16x32xf32> to vector<16x32xbf16>
    %cst_44 = arith.constant dense<0.000000e+00> : vector<16x128xf32>
    %82 = tpu.matmul %81, %79, %cst_44 {dimension_numbers = #tpu.dot_dimension_numbers<[1], [0], [0], [1], [0, 0, 1, 1], [], []>} : vector<16x32xbf16>, vector<32x128xbf16>, vector<16x128xf32> -> vector<16x128xf32>
    %83 = arith.truncf %82 : vector<16x128xf32> to vector<16x128xbf16>
    %cst_45 = arith.constant dense<0.000000e+00> : vector<16x128xf32>
    %84 = tpu.matmul %0, %83, %cst_45 {dimension_numbers = #tpu.dot_dimension_numbers<[1], [0], [0], [1], [0, 0, 1, 1], [], []>} : vector<16x16xbf16>, vector<16x128xbf16>, vector<16x128xf32> -> vector<16x128xf32>
    %85 = vector.broadcast %80 : vector<1x128xf32> to vector<16x128xf32>
    %86 = arith.addf %84, %85 : vector<16x128xf32>
    %c0_46 = arith.constant 0 : index
    %c0_47 = arith.constant 0 : index
    %87 = vector.load %arg4[%c0_46, %c0_47] : memref<16x128xf32, #tpu.memory_space<vmem>>, vector<16x128xf32>
    tpu.vector_store %arg4[%c0_46, %c0_47], %86 {strides = array<i32>} : memref<16x128xf32, #tpu.memory_space<vmem>>, vector<16x128xf32>,
    return
  }
}

</mosaic_0001>

<llo_original>
// kernel: gmt_recon_forward.1
$region0: #{gmt_recon_forward.1}
  #allocation0 [shape = 'u32[]', space=smem, size = 0x4, offset = 0x4, fixed_abs, tag = 'smem constant byte address 0x4 - core index']
  #allocation1 [shape = 'u32[144,128]{1,0:T(1,128)}', space=vmem, size = 0x12000, scoped, tag = 'internal scratch']
  %s0 = inlined_call_operand.vmem [shape: bf16[16,48], index: 0, kind: input, shape index: {}]
  %s1 = inlined_call_operand.vmem [shape: bf16[32,384], index: 1, kind: input, shape index: {}]
  %s2 = inlined_call_operand.hbm [shape: f32[16,384], index: 2, kind: input, shape index: {}]
  %s3 = inlined_call_operand.vmem [shape: f32[8,16], index: 3, kind: input, shape index: {}]
  %s4 = inlined_call_operand.hbm [shape: f32[16,128], index: 4, kind: output, shape index: {}]
  %s5 = sld [smem:[#allocation0]]
  $region30: #{gmt_recon_forward.1} parent=0
    _
  %s7 = ssub.s32 1, %s5
  %s8 = scalar_select 0, %s7, %s5
  $region1: #{gmt_recon_forward.1} parent=0
    #allocation2 [shape = 'u8[24576]{0}', space=vmem, size = 0x6000, scoped, tag = 'input window, operand 2, single buffered']
    #allocation3 [shape = 's32[1]{0}', space=sflag, size = 0x4, scoped, tag = 'scoped memory for gmt_recon_forward.1']
    #allocation4 [shape = 's32[1]{0}', space=sflag, size = 0x4, scoped, tag = 'scoped memory for gmt_recon_forward.1']
    #allocation5 [shape = 'u8[8192]{0}', space=vmem, size = 0x2000, scoped, tag = 'output window, operand 0, single buffered']
    %9 = vsyncpa [#allocation3], 0
    %10 = vsyncpa [#allocation4], 0
    // Predicated region
    $region2: #{gmt_recon_forward.1} parent=1 // pred_check
      _
    $region3: #{gmt_recon_forward.1} parent=1 // pred_check_branch
      %12 = sbr.rel (0) target = $region5
    $region4: #{gmt_recon_forward.1} parent=1 // pred_region
      _
    $region5: #{gmt_recon_forward.1} parent=1 // pred_fallthru
      _
    // Predicated region
    $region6: #{gmt_recon_forward.1} parent=1 // pred_check
      _
    $region7: #{gmt_recon_forward.1} parent=1 // pred_check_branch
      %14 = sbr.rel (0) target = $region9
    $region8: #{gmt_recon_forward.1} parent=1 // pred_region
      _
    $region9: #{gmt_recon_forward.1} parent=1 // pred_fallthru
      _
    // Predicated region
    $region10: #{gmt_recon_forward.1} parent=1 // pred_check
      _
    $region11: #{gmt_recon_forward.1} parent=1 // pred_check_branch
      %16 = sbr.rel (0) target = $region13
    $region12: #{gmt_recon_forward.1} parent=1 // pred_region
      %s18 = ssub.s32 768, 768
      %19 = vsyncadd [#allocation3], %s18
      %s20 = sshll.u32 [#allocation2], 4
      %s21 = int_to_ptr.vmem [resolvable:$true] %s20
      %26 = dma.hbm_to_vmem [thread:$0]  %s2, 768, %s21, [#allocation3], 384, 384, 24
    $region13: #{gmt_recon_forward.1} parent=1 // pred_fallthru
      _
    // Predicated region
    $region14: #{gmt_recon_forward.1} parent=1 // pred_check
      _
    $region15: #{gmt_recon_forward.1} parent=1 // pred_check_branch
      %28 = sbr.rel (0) target = $region17
    $region16: #{gmt_recon_forward.1} parent=1 // pred_region
      _
    $region17: #{gmt_recon_forward.1} parent=1 // pred_fallthru
      _
    // Predicated region
    $region18: #{gmt_recon_forward.1} parent=1 // pred_check
      _
    $region19: #{gmt_recon_forward.1} parent=1 // pred_check_branch
      %30 = sbr.rel (0) target = $region21
    $region20: #{gmt_recon_forward.1} parent=1 // pred_region
      %31 = dma.done [#allocation3], 768
    $region21: #{gmt_recon_forward.1} parent=1 // pred_fallthru
      _
    %v33 = vld [vmem:[%s0] sm:$0xf]
    %v34 = vld [vmem:[%s0 + $0x4] sm:$0xf]
    %v35 = vld [vmem:[%s1 + $0x8] sm:$0xf]
    %v36 = vld [vmem:[%s1 + $0x14] sm:$0xf]
    %v37 = vld [vmem:[%s1 + $0x20] sm:$0xf]
    %v38 = vld [vmem:[%s1 + $0x2c] sm:$0xf]
    %v39 = vld [vmem:[#allocation2 + $0x10] ss:$0 sm:$0xff]
    %v42 = vunpack.c.l.b16 %v33
    %v43 = vunpack.c.l.b16 %v34
    %v44 = vpack.c.b16 %v43, %v42
    %45 = vrot.lane.b32.xlu0 %v44, 112
    %v46 = vpop.permute.xlu0 %45
    %v51 = vunpack.c.l.b16 %v35
    %v52 = vunpack.c.l.b16 %v36
    %v53 = vunpack.c.l.b16 %v37
    %v54 = vunpack.c.l.b16 %v38
    %v55 = vpack.c.b16 %v52, %v51
    %v56 = vpack.c.b16 %v54, %v53
    %57 = vrot.lane.b32.xlu0 %v55, 64
    %v58 = vpop.permute.xlu0 %57
    %59 = vrot.lane.b32.xlu0 %v56, 64
    %v60 = vpop.permute.xlu0 %59
    %vm63 = vcmask 261120
    %v65 = vsel %vm63, %v46, 0
    %67 = vmatprep.subr.bf16.mxu0 0
    %68 = vmatpush1.bf16.msra.mxu0 %v58
    %69 = vmatprep.subr.bf16.mxu0 0
    %70 = vmatpush1.bf16.msra.mxu0 %v60
    %71 = vmatprep.subr.bf16.mxu0 0
    %72 = vmatpush1.bf16.msra.mxu0 0
    %73 = vmatprep.subr.bf16.mxu0 0
    %74 = vmatpush1.bf16.msra.mxu0 0
    %75 = vmatprep.subr.bf16.mxu0 0
    %76 = vmatpush1.bf16.msra.mxu0 0
    %77 = vmatprep.subr.bf16.mxu0 0
    %78 = vmatpush1.bf16.msra.mxu0 0
    %79 = vmatprep.subr.bf16.mxu0 0
    %80 = vmatpush1.bf16.msra.mxu0 0
    %81 = vmatprep.subr.bf16.mxu0 0
    %82 = vmatpush1.bf16.msra.mxu0 0
    %83 = vmatprep.subr.bf16.mxu0 0
    %84 = vmatpush1.bf16.msra.mxu0 0
    %85 = vmatprep.subr.bf16.mxu0 0
    %86 = vmatpush1.bf16.msra.mxu0 0
    %87 = vmatprep.subr.bf16.mxu0 0
    %88 = vmatpush1.bf16.msra.mxu0 0
    %89 = vmatprep.subr.bf16.mxu0 0
    %90 = vmatpush1.bf16.msra.mxu0 0
    %91 = vmatprep.subr.bf16.mxu0 0
    %92 = vmatpush1.bf16.msra.mxu0 0
    %93 = vmatprep.subr.bf16.mxu0 0
    %94 = vmatpush1.bf16.msra.mxu0 0
    %95 = vmatprep.subr.bf16.mxu0 0
    %96 = vmatpush1.bf16.msra.mxu0 0
    %97 = vmatprep.subr.bf16.mxu0 0
    %98 = vmatpush1.bf16.msra.mxu0 0
    %99 = vmatprep.mubr.bf16.mxu0 0
    %100 = vmatmul.mubr.bf16.gmra.mrb[0].mxu0 %v65
    %v101 = vpop.f32.mrb[0].mxu0
    %v102 = vadd.f32 0.0, %v101
    %v103 = vpop.f32.mrb[0].mxu0
    %v104 = vpop.f32.mrb[0].mxu0
    %v105 = vadd.f32 0.0, %v104
    %v106 = vpop.f32.mrb[0].mxu0
    %107 = vdwg.mxu0
    %v108 = vpack.c.bf16 %v105, %v102
    %110 = vrot.lane.b32.xlu0 %v39, 64
    %v111 = vpop.permute.xlu0 %110
    %vm113 = vcmask 130048
    %v115 = vsel %vm113, %v44, 0
    %117 = vmatprep.subr.bf16.mxu0 0
    %118 = vmatpush1.bf16.msra.mxu0 %v108
    %119 = vmatprep.subr.bf16.mxu0 0
    %120 = vmatpush1.bf16.msra.mxu0 0
    %121 = vmatprep.subr.bf16.mxu0 0
    %122 = vmatpush1.bf16.msra.mxu0 0
    %123 = vmatprep.subr.bf16.mxu0 0
    %124 = vmatpush1.bf16.msra.mxu0 0
    %125 = vmatprep.subr.bf16.mxu0 0
    %126 = vmatpush1.bf16.msra.mxu0 0
    %127 = vmatprep.subr.bf16.mxu0 0
    %128 = vmatpush1.bf16.msra.mxu0 0
    %129 = vmatprep.subr.bf16.mxu0 0
    %130 = vmatpush1.bf16.msra.mxu0 0
    %131 = vmatprep.subr.bf16.mxu0 0
    %132 = vmatpush1.bf16.msra.mxu0 0
    %133 = vmatprep.subr.bf16.mxu0 0
    %134 = vmatpush1.bf16.msra.mxu0 0
    %135 = vmatprep.subr.bf16.mxu0 0
    %136 = vmatpush1.bf16.msra.mxu0 0
    %137 = vmatprep.subr.bf16.mxu0 0
    %138 = vmatpush1.bf16.msra.mxu0 0
    %139 = vmatprep.subr.bf16.mxu0 0
    %140 = vmatpush1.bf16.msra.mxu0 0
    %141 = vmatprep.subr.bf16.mxu0 0
    %142 = vmatpush1.bf16.msra.mxu0 0
    %143 = vmatprep.subr.bf16.mxu0 0
    %144 = vmatpush1.bf16.msra.mxu0 0
    %145 = vmatprep.subr.bf16.mxu0 0
    %146 = vmatpush1.bf16.msra.mxu0 0
    %147 = vmatprep.subr.bf16.mxu0 0
    %148 = vmatpush1.bf16.msra.mxu0 0
    %149 = vmatprep.mubr.bf16.mxu0 0
    %150 = vmatmul.mubr.bf16.gmra.mrb[0].mxu0 %v115
    %v151 = vpop.f32.mrb[0].mxu0
    %v152 = vadd.f32 %v111, %v151
    %v153 = vpop.f32.mrb[0].mxu0
    %v154 = vpop.f32.mrb[0].mxu0
    %v155 = vadd.f32 %v111, %v154
    %v156 = vpop.f32.mrb[0].mxu0
    %157 = vdwg.mxu0
    %v158 = vmax.f32 %v152, 0.0
    %v159 = vmax.f32 %v155, 0.0
    %v160 = vld [vmem:[%s1] sm:$0xf]
    %v161 = vld [vmem:[%s1 + $0xc] sm:$0xf]
    %v162 = vld [vmem:[%s1 + $0x18] sm:$0xf]
    %v163 = vld [vmem:[%s1 + $0x24] sm:$0xf]
    %v164 = vld [vmem:[#allocation2] ss:$0 sm:$0xff]
    %v165 = vpack.c.bf16 %v159, %v158
    %v170 = vunpack.c.l.b16 %v160
    %v171 = vunpack.c.l.b16 %v161
    %v172 = vunpack.c.l.b16 %v162
    %v173 = vunpack.c.l.b16 %v163
    %v174 = vpack.c.b16 %v171, %v170
    %v175 = vpack.c.b16 %v173, %v172
    %176 = vrot.lane.b32.xlu0 %v174, 64
    %v177 = vpop.permute.xlu0 %176
    %178 = vrot.lane.b32.xlu0 %v175, 64
    %v179 = vpop.permute.xlu0 %178
    %v183 = vsel %vm63, %v165, 0
    %185 = vmatprep.subr.bf16.mxu0 0
    %186 = vmatpush1.bf16.msra.mxu0 %v177
    %187 = vmatprep.subr.bf16.mxu0 0
    %188 = vmatpush1.bf16.msra.mxu0 %v179
    %189 = vmatprep.subr.bf16.mxu0 0
    %190 = vmatpush1.bf16.msra.mxu0 0
    %191 = vmatprep.subr.bf16.mxu0 0
    %192 = vmatpush1.bf16.msra.mxu0 0
    %193 = vmatprep.subr.bf16.mxu0 0
    %194 = vmatpush1.bf16.msra.mxu0 0
    %195 = vmatprep.subr.bf16.mxu0 0
    %196 = vmatpush1.bf16.msra.mxu0 0
    %197 = vmatprep.subr.bf16.mxu0 0
    %198 = vmatpush1.bf16.msra.mxu0 0
    %199 = vmatprep.subr.bf16.mxu0 0
    %200 = vmatpush1.bf16.msra.mxu0 0
    %201 = vmatprep.subr.bf16.mxu0 0
    %202 = vmatpush1.bf16.msra.mxu0 0
    %203 = vmatprep.subr.bf16.mxu0 0
    %204 = vmatpush1.bf16.msra.mxu0 0
    %205 = vmatprep.subr.bf16.mxu0 0
    %206 = vmatpush1.bf16.msra.mxu0 0
    %207 = vmatprep.subr.bf16.mxu0 0
    %208 = vmatpush1.bf16.msra.mxu0 0
    %209 = vmatprep.subr.bf16.mxu0 0
    %210 = vmatpush1.bf16.msra.mxu0 0
    %211 = vmatprep.subr.bf16.mxu0 0
    %212 = vmatpush1.bf16.msra.mxu0 0
    %213 = vmatprep.subr.bf16.mxu0 0
    %214 = vmatpush1.bf16.msra.mxu0 0
    %215 = vmatprep.subr.bf16.mxu0 0
    %216 = vmatpush1.bf16.msra.mxu0 0
    %217 = vmatprep.mubr.bf16.mxu0 0
    %218 = vmatmul.mubr.bf16.gmra.mrb[0].mxu0 %v183
    %v219 = vpop.f32.mrb[0].mxu0
    %v220 = vadd.f32 0.0, %v219
    %v221 = vpop.f32.mrb[0].mxu0
    %v222 = vpop.f32.mrb[0].mxu0
    %v223 = vadd.f32 0.0, %v222
    %v224 = vpop.f32.mrb[0].mxu0
    %225 = vdwg.mxu0
    %v226 = vpack.c.bf16 %v223, %v220
    %228 = vrot.lane.b32.xlu0 %v164, 64
    %v229 = vpop.permute.xlu0 %228
    %231 = vmatprep.subr.bf16.mxu0 0
    %232 = vmatpush1.bf16.msra.mxu0 %v226
    %233 = vmatprep.subr.bf16.mxu0 0
    %234 = vmatpush1.bf16.msra.mxu0 0
    %235 = vmatprep.subr.bf16.mxu0 0
    %236 = vmatpush1.bf16.msra.mxu0 0
    %237 = vmatprep.subr.bf16.mxu0 0
    %238 = vmatpush1.bf16.msra.mxu0 0
    %239 = vmatprep.subr.bf16.mxu0 0
    %240 = vmatpush1.bf16.msra.mxu0 0
    %241 = vmatprep.subr.bf16.mxu0 0
    %242 = vmatpush1.bf16.msra.mxu0 0
    %243 = vmatprep.subr.bf16.mxu0 0
    %244 = vmatpush1.bf16.msra.mxu0 0
    %245 = vmatprep.subr.bf16.mxu0 0
    %246 = vmatpush1.bf16.msra.mxu0 0
    %247 = vmatprep.subr.bf16.mxu0 0
    %248 = vmatpush1.bf16.msra.mxu0 0
    %249 = vmatprep.subr.bf16.mxu0 0
    %250 = vmatpush1.bf16.msra.mxu0 0
    %251 = vmatprep.subr.bf16.mxu0 0
    %252 = vmatpush1.bf16.msra.mxu0 0
    %253 = vmatprep.subr.bf16.mxu0 0
    %254 = vmatpush1.bf16.msra.mxu0 0
    %255 = vmatprep.subr.bf16.mxu0 0
    %256 = vmatpush1.bf16.msra.mxu0 0
    %257 = vmatprep.subr.bf16.mxu0 0
    %258 = vmatpush1.bf16.msra.mxu0 0
    %259 = vmatprep.subr.bf16.mxu0 0
    %260 = vmatpush1.bf16.msra.mxu0 0
    %261 = vmatprep.subr.bf16.mxu0 0
    %262 = vmatpush1.bf16.msra.mxu0 0
    %263 = vmatprep.mubr.bf16.mxu0 0
    %264 = vmatmul.mubr.bf16.gmra.mrb[0].mxu0 %v115
    %v265 = vpop.f32.mrb[0].mxu0
    %v266 = vadd.f32 %v229, %v265
    %v267 = vpop.f32.mrb[0].mxu0
    %v268 = vpop.f32.mrb[0].mxu0
    %v269 = vadd.f32 %v229, %v268
    %v270 = vpop.f32.mrb[0].mxu0
    %271 = vdwg.mxu0
    %v272 = vmax.f32 %v266, 0.0
    %v273 = vmax.f32 %v269, 0.0
    %v274 = vpack.c.bf16 %v273, %v272
    %v278 = vsel %vm63, %v274, 0
    %280 = vmatprep.subr.bf16.mxu0 0
    %281 = vmatpush1.bf16.msra.mxu0 %v174
    %282 = vmatprep.subr.bf16.mxu0 0
    %283 = vmatpush1.bf16.msra.mxu0 %v175
    %284 = vmatprep.subr.bf16.mxu0 0
    %285 = vmatpush1.bf16.msra.mxu0 0
    %286 = vmatprep.subr.bf16.mxu0 0
    %287 = vmatpush1.bf16.msra.mxu0 0
    %288 = vmatprep.subr.bf16.mxu0 0
    %289 = vmatpush1.bf16.msra.mxu0 0
    %290 = vmatprep.subr.bf16.mxu0 0
    %291 = vmatpush1.bf16.msra.mxu0 0
    %292 = vmatprep.subr.bf16.mxu0 0
    %293 = vmatpush1.bf16.msra.mxu0 0
    %294 = vmatprep.subr.bf16.mxu0 0
    %295 = vmatpush1.bf16.msra.mxu0 0
    %296 = vmatprep.subr.bf16.mxu0 0
    %297 = vmatpush1.bf16.msra.mxu0 0
    %298 = vmatprep.subr.bf16.mxu0 0
    %299 = vmatpush1.bf16.msra.mxu0 0
    %300 = vmatprep.subr.bf16.mxu0 0
    %301 = vmatpush1.bf16.msra.mxu0 0
    %302 = vmatprep.subr.bf16.mxu0 0
    %303 = vmatpush1.bf16.msra.mxu0 0
    %304 = vmatprep.subr.bf16.mxu0 0
    %305 = vmatpush1.bf16.msra.mxu0 0
    %306 = vmatprep.subr.bf16.mxu0 0
    %307 = vmatpush1.bf16.msra.mxu0 0
    %308 = vmatprep.subr.bf16.mxu0 0
    %309 = vmatpush1.bf16.msra.mxu0 0
    %310 = vmatprep.subr.bf16.mxu0 0
    %311 = vmatpush1.bf16.msra.mxu0 0
    %312 = vmatprep.mubr.bf16.mxu0 0
    %313 = vmatmul.mubr.bf16.gmra.mrb[0].mxu0 %v278
    %v314 = vpop.f32.mrb[0].mxu0
    %v315 = vadd.f32 %v164, %v314
    %v316 = vpop.f32.mrb[0].mxu0
    %v317 = vpop.f32.mrb[0].mxu0
    %v318 = vadd.f32 %v164, %v317
    %v319 = vpop.f32.mrb[0].mxu0
    %320 = vdwg.mxu0
    %v321 = vld [vmem:[#allocation2 + $0x18] sm:$0xf]
    %v322 = vpack.c.bf16 %v321, %v321
    %v323 = vpack.c.bf16 %v318, %v315
    %v325 = vsel %vm63, %v322, 0
    %v328 = vsel %vm63, %v323, 0
    %330 = vmatprep.subr.bf16.mxu0 0
    %331 = vmatpush1.bf16.xpose.msra.mxu0 %v328
    %332 = vmatprep.subr.bf16.mxu0 0
    %333 = vmatpush1.bf16.xpose.msra.mxu0 0
    %334 = vmatprep.subr.bf16.mxu0 0
    %335 = vmatpush1.bf16.xpose.msra.mxu0 0
    %336 = vmatprep.subr.bf16.mxu0 0
    %337 = vmatpush1.bf16.xpose.msra.mxu0 0
    %338 = vmatprep.subr.bf16.mxu0 0
    %339 = vmatpush1.bf16.xpose.msra.mxu0 0
    %340 = vmatprep.subr.bf16.mxu0 0
    %341 = vmatpush1.bf16.xpose.msra.mxu0 0
    %342 = vmatprep.subr.bf16.mxu0 0
    %343 = vmatpush1.bf16.xpose.msra.mxu0 0
    %344 = vmatprep.subr.bf16.mxu0 0
    %345 = vmatpush1.bf16.xpose.msra.mxu0 0
    %346 = vmatprep.subr.bf16.mxu0 0
    %347 = vmatpush1.bf16.xpose.msra.mxu0 0
    %348 = vmatprep.subr.bf16.mxu0 0
    %349 = vmatpush1.bf16.xpose.msra.mxu0 0
    %350 = vmatprep.subr.bf16.mxu0 0
    %351 = vmatpush1.bf16.xpose.msra.mxu0 0
    %352 = vmatprep.subr.bf16.mxu0 0
    %353 = vmatpush1.bf16.xpose.msra.mxu0 0
    %354 = vmatprep.subr.bf16.mxu0 0
    %355 = vmatpush1.bf16.xpose.msra.mxu0 0
    %356 = vmatprep.subr.bf16.mxu0 0
    %357 = vmatpush1.bf16.xpose.msra.mxu0 0
    %358 = vmatprep.subr.bf16.mxu0 0
    %359 = vmatpush1.bf16.xpose.msra.mxu0 0
    %360 = vmatprep.subr.bf16.mxu0 0
    %361 = vmatpush1.bf16.xpose.msra.mxu0 0
    %362 = vmatprep.mubr.bf16.mxu0 0
    %363 = vmatmul.mubr.bf16.gmra.mrb[0].mxu0 %v325
    %v364 = vpop.f32.mrb[0].mxu0
    %v365 = vadd.f32 0.0, %v364
    %v366 = vpop.f32.mrb[0].mxu0
    %v367 = vpop.f32.mrb[0].mxu0
    %v368 = vpop.f32.mrb[0].mxu0
    %369 = vdwg.mxu0
    %v371 = vrot.slane %v365, 4
    %vm373 = vcmask 1043456
    %v374 = vsel %vm373, %v365, %v371
    %v375 = vld [vmem:[%s3] sm:$0xff]
    %v376 = vadd.f32 %v374, %v375
    %v377 = vsel %vm113, %v376, -inf
    %378 = vmax.xlane.f32.xlu0 %v377
    %v379 = vpop.xlane.xlu0 %378
    %v380 = vsub.f32 %v376, %v379
    %v381 = vmul.f32 %v380, 1.442695
    %v382 = vpow.pop %v381
    %v383 = vsel %vm113, %v382, 0.0
    %384 = vadd.xlane.f32.xlu0 %v383
    %v385 = vpop.xlane.xlu0 %384
    %v386 = vrcp.pop %v385
    %v387 = vmul.f32 %v382, %v386
    %v389 = vrot.slane %v321, 4
    %v391 = vsel %vm373, %v321, %v389
    %v392 = vpack.c.bf16 %v387, %v387
    %394 = vrot.lane.b32.xlu0 %v323, 96
    %v395 = vpop.permute.xlu0 %394
    %v398 = vsel %vm113, %v392, 0
    %400 = vmatprep.subr.bf16.mxu0 0
    %401 = vmatpush1.bf16.msra.mxu0 %v395
    %402 = vmatprep.subr.bf16.mxu0 0
    %403 = vmatpush1.bf16.msra.mxu0 0
    %404 = vmatprep.subr.bf16.mxu0 0
    %405 = vmatpush1.bf16.msra.mxu0 0
    %406 = vmatprep.subr.bf16.mxu0 0
    %407 = vmatpush1.bf16.msra.mxu0 0
    %408 = vmatprep.subr.bf16.mxu0 0
    %409 = vmatpush1.bf16.msra.mxu0 0
    %410 = vmatprep.subr.bf16.mxu0 0
    %411 = vmatpush1.bf16.msra.mxu0 0
    %412 = vmatprep.subr.bf16.mxu0 0
    %413 = vmatpush1.bf16.msra.mxu0 0
    %414 = vmatprep.subr.bf16.mxu0 0
    %415 = vmatpush1.bf16.msra.mxu0 0
    %416 = vmatprep.subr.bf16.mxu0 0
    %417 = vmatpush1.bf16.msra.mxu0 0
    %418 = vmatprep.subr.bf16.mxu0 0
    %419 = vmatpush1.bf16.msra.mxu0 0
    %420 = vmatprep.subr.bf16.mxu0 0
    %421 = vmatpush1.bf16.msra.mxu0 0
    %422 = vmatprep.subr.bf16.mxu0 0
    %423 = vmatpush1.bf16.msra.mxu0 0
    %424 = vmatprep.subr.bf16.mxu0 0
    %425 = vmatpush1.bf16.msra.mxu0 0
    %426 = vmatprep.subr.bf16.mxu0 0
    %427 = vmatpush1.bf16.msra.mxu0 0
    %428 = vmatprep.subr.bf16.mxu0 0
    %429 = vmatpush1.bf16.msra.mxu0 0
    %430 = vmatprep.subr.bf16.mxu0 0
    %431 = vmatpush1.bf16.msra.mxu0 0
    %432 = vmatprep.mubr.bf16.mxu0 0
    %433 = vmatmul.mubr.bf16.gmra.mrb[0].mxu0 %v398
    %v434 = vpop.f32.mrb[0].mxu0
    %v435 = vadd.f32 0.0, %v434
    %v436 = vpop.f32.mrb[0].mxu0
    %v437 = vpop.f32.mrb[0].mxu0
    %v438 = vpop.f32.mrb[0].mxu0
    %439 = vdwg.mxu0
    %v440 = vadd.f32 %v391, %v435
    %v441 = vpack.c.bf16 %v440, %v440
    %442 = vrot.lane.b32.xlu0 %v174, 32
    %v443 = vpop.permute.xlu0 %442
    %444 = vrot.lane.b32.xlu0 %v175, 32
    %v445 = vpop.permute.xlu0 %444
    %448 = vrot.lane.b32.xlu0 %v164, 32
    %v449 = vpop.permute.xlu0 %448
    %v452 = vsel %vm63, %v441, 0
    %454 = vmatprep.subr.bf16.mxu0 0
    %455 = vmatpush1.bf16.msra.mxu0 %v443
    %456 = vmatprep.subr.bf16.mxu0 0
    %457 = vmatpush1.bf16.msra.mxu0 %v445
    %458 = vmatprep.subr.bf16.mxu0 0
    %459 = vmatpush1.bf16.msra.mxu0 0
    %460 = vmatprep.subr.bf16.mxu0 0
    %461 = vmatpush1.bf16.msra.mxu0 0
    %462 = vmatprep.subr.bf16.mxu0 0
    %463 = vmatpush1.bf16.msra.mxu0 0
    %464 = vmatprep.subr.bf16.mxu0 0
    %465 = vmatpush1.bf16.msra.mxu0 0
    %466 = vmatprep.subr.bf16.mxu0 0
    %467 = vmatpush1.bf16.msra.mxu0 0
    %468 = vmatprep.subr.bf16.mxu0 0
    %469 = vmatpush1.bf16.msra.mxu0 0
    %470 = vmatprep.subr.bf16.mxu0 0
    %471 = vmatpush1.bf16.msra.mxu0 0
    %472 = vmatprep.subr.bf16.mxu0 0
    %473 = vmatpush1.bf16.msra.mxu0 0
    %474 = vmatprep.subr.bf16.mxu0 0
    %475 = vmatpush1.bf16.msra.mxu0 0
    %476 = vmatprep.subr.bf16.mxu0 0
    %477 = vmatpush1.bf16.msra.mxu0 0
    %478 = vmatprep.subr.bf16.mxu0 0
    %479 = vmatpush1.bf16.msra.mxu0 0
    %480 = vmatprep.subr.bf16.mxu0 0
    %481 = vmatpush1.bf16.msra.mxu0 0
    %482 = vmatprep.subr.bf16.mxu0 0
    %483 = vmatpush1.bf16.msra.mxu0 0
    %484 = vmatprep.subr.bf16.mxu0 0
    %485 = vmatpush1.bf16.msra.mxu0 0
    %486 = vmatprep.mubr.bf16.mxu0 0
    %487 = vmatmul.mubr.bf16.gmra.mrb[0].mxu0 %v452
    %v488 = vpop.f32.mrb[0].mxu0
    %v489 = vadd.f32 %v449, %v488
    %v490 = vpop.f32.mrb[0].mxu0
    %v491 = vpop.f32.mrb[0].mxu0
    %v492 = vpop.f32.mrb[0].mxu0
    %493 = vdwg.mxu0
    %v494 = vmax.f32 %v489, 0.0
    %v495 = vadd.f32 %v440, %v494
    %v496 = vpack.c.bf16 %v495, %v495
    %v497 = vld [vmem:[%s1 + $0x4] sm:$0xf]
    %v498 = vld [vmem:[%s1 + $0x10] sm:$0xf]
    %v499 = vld [vmem:[%s1 + $0x1c] sm:$0xf]
    %v500 = vld [vmem:[%s1 + $0x28] sm:$0xf]
    %v501 = vld [vmem:[#allocation2 + $0x8] ss:$0 sm:$0xff]
    %v506 = vunpack.c.l.b16 %v497
    %v507 = vunpack.c.l.b16 %v498
    %v508 = vunpack.c.l.b16 %v499
    %v509 = vunpack.c.l.b16 %v500
    %v510 = vpack.c.b16 %v507, %v506
    %v511 = vpack.c.b16 %v509, %v508
    %v515 = vsel %vm63, %v496, 0
    %517 = vmatprep.subr.bf16.mxu0 0
    %518 = vmatpush1.bf16.msra.mxu0 %v510
    %519 = vmatprep.subr.bf16.mxu0 0
    %520 = vmatpush1.bf16.msra.mxu0 %v511
    %521 = vmatprep.subr.bf16.mxu0 0
    %522 = vmatpush1.bf16.msra.mxu0 0
    %523 = vmatprep.subr.bf16.mxu0 0
    %524 = vmatpush1.bf16.msra.mxu0 0
    %525 = vmatprep.subr.bf16.mxu0 0
    %526 = vmatpush1.bf16.msra.mxu0 0
    %527 = vmatprep.subr.bf16.mxu0 0
    %528 = vmatpush1.bf16.msra.mxu0 0
    %529 = vmatprep.subr.bf16.mxu0 0
    %530 = vmatpush1.bf16.msra.mxu0 0
    %531 = vmatprep.subr.bf16.mxu0 0
    %532 = vmatpush1.bf16.msra.mxu0 0
    %533 = vmatprep.subr.bf16.mxu0 0
    %534 = vmatpush1.bf16.msra.mxu0 0
    %535 = vmatprep.subr.bf16.mxu0 0
    %536 = vmatpush1.bf16.msra.mxu0 0
    %537 = vmatprep.subr.bf16.mxu0 0
    %538 = vmatpush1.bf16.msra.mxu0 0
    %539 = vmatprep.subr.bf16.mxu0 0
    %540 = vmatpush1.bf16.msra.mxu0 0
    %541 = vmatprep.subr.bf16.mxu0 0
    %542 = vmatpush1.bf16.msra.mxu0 0
    %543 = vmatprep.subr.bf16.mxu0 0
    %544 = vmatpush1.bf16.msra.mxu0 0
    %545 = vmatprep.subr.bf16.mxu0 0
    %546 = vmatpush1.bf16.msra.mxu0 0
    %547 = vmatprep.subr.bf16.mxu0 0
    %548 = vmatpush1.bf16.msra.mxu0 0
    %549 = vmatprep.mubr.bf16.mxu0 0
    %550 = vmatmul.mubr.bf16.gmra.mrb[0].mxu0 %v515
    %v551 = vpop.f32.mrb[0].mxu0
    %v552 = vadd.f32 %v501, %v551
    %v553 = vpop.f32.mrb[0].mxu0
    %v554 = vpop.f32.mrb[0].mxu0
    %v555 = vpop.f32.mrb[0].mxu0
    %556 = vdwg.mxu0
    %v557 = vpack.c.bf16 %v552, %v552
    %558 = vxpose.xlu0.c.b16.start [1/8] %v392, 128
    %559 = vxpose.xlu0.c.b16.cont [2/8] 0, 128
    %560 = vxpose.xlu0.c.b16.cont [3/8] 0, 128
    %561 = vxpose.xlu0.c.b16.cont [4/8] 0, 128
    %562 = vxpose.xlu0.c.b16.cont [5/8] 0, 128
    %563 = vxpose.xlu0.c.b16.cont [6/8] 0, 128
    %564 = vxpose.xlu0.c.b16.cont [7/8] 0, 128
    %565 = vxpose.xlu0.c.b16.end [8/8] 0, 128
    %v566 = vpop.trf.xlu0
    %v567 = vpop.trf.xlu0
    %v568 = vpop.trf.xlu0
    %v569 = vpop.trf.xlu0
    %v570 = vpop.trf.xlu0
    %v571 = vpop.trf.xlu0
    %v572 = vpop.trf.xlu0
    %v573 = vpop.trf.xlu0
    %vm574 = vcmask 64512
    %v576 = vsel %vm574, %v566, 0
    %v579 = vsel %vm373, %v557, 0
    %581 = vmatprep.subr.bf16.mxu0 0
    %582 = vmatpush1.bf16.msra.mxu0 %v579
    %583 = vmatprep.subr.bf16.mxu0 0
    %584 = vmatpush1.bf16.msra.mxu0 0
    %585 = vmatprep.subr.bf16.mxu0 0
    %586 = vmatpush1.bf16.msra.mxu0 0
    %587 = vmatprep.subr.bf16.mxu0 0
    %588 = vmatpush1.bf16.msra.mxu0 0
    %589 = vmatprep.subr.bf16.mxu0 0
    %590 = vmatpush1.bf16.msra.mxu0 0
    %591 = vmatprep.subr.bf16.mxu0 0
    %592 = vmatpush1.bf16.msra.mxu0 0
    %593 = vmatprep.subr.bf16.mxu0 0
    %594 = vmatpush1.bf16.msra.mxu0 0
    %595 = vmatprep.subr.bf16.mxu0 0
    %596 = vmatpush1.bf16.msra.mxu0 0
    %597 = vmatprep.subr.bf16.mxu0 0
    %598 = vmatpush1.bf16.msra.mxu0 0
    %599 = vmatprep.subr.bf16.mxu0 0
    %600 = vmatpush1.bf16.msra.mxu0 0
    %601 = vmatprep.subr.bf16.mxu0 0
    %602 = vmatpush1.bf16.msra.mxu0 0
    %603 = vmatprep.subr.bf16.mxu0 0
    %604 = vmatpush1.bf16.msra.mxu0 0
    %605 = vmatprep.subr.bf16.mxu0 0
    %606 = vmatpush1.bf16.msra.mxu0 0
    %607 = vmatprep.subr.bf16.mxu0 0
    %608 = vmatpush1.bf16.msra.mxu0 0
    %609 = vmatprep.subr.bf16.mxu0 0
    %610 = vmatpush1.bf16.msra.mxu0 0
    %611 = vmatprep.subr.bf16.mxu0 0
    %612 = vmatpush1.bf16.msra.mxu0 0
    %613 = vmatprep.mubr.bf16.mxu0 0
    %614 = vmatmul.mubr.bf16.gmra.mrb[0].mxu0 %v576
    %v615 = vpop.f32.mrb[0].mxu0
    %v616 = vadd.f32 0.0, %v615
    %v617 = vpop.f32.mrb[0].mxu0
    %v618 = vpop.f32.mrb[0].mxu0
    %v619 = vadd.f32 0.0, %v618
    %v620 = vpop.f32.mrb[0].mxu0
    %621 = vdwg.mxu0
    %v622 = vpack.c.bf16 %v619, %v616
    %623 = vrot.lane.b32.xlu0 %v510, 96
    %v624 = vpop.permute.xlu0 %623
    %625 = vrot.lane.b32.xlu0 %v511, 96
    %v626 = vpop.permute.xlu0 %625
    %v630 = vsel %vm63, %v622, 0
    %632 = vmatprep.subr.bf16.mxu0 0
    %633 = vmatpush1.bf16.msra.mxu0 %v624
    %634 = vmatprep.subr.bf16.mxu0 0
    %635 = vmatpush1.bf16.msra.mxu0 %v626
    %636 = vmatprep.subr.bf16.mxu0 0
    %637 = vmatpush1.bf16.msra.mxu0 0
    %638 = vmatprep.subr.bf16.mxu0 0
    %639 = vmatpush1.bf16.msra.mxu0 0
    %640 = vmatprep.subr.bf16.mxu0 0
    %641 = vmatpush1.bf16.msra.mxu0 0
    %642 = vmatprep.subr.bf16.mxu0 0
    %643 = vmatpush1.bf16.msra.mxu0 0
    %644 = vmatprep.subr.bf16.mxu0 0
    %645 = vmatpush1.bf16.msra.mxu0 0
    %646 = vmatprep.subr.bf16.mxu0 0
    %647 = vmatpush1.bf16.msra.mxu0 0
    %648 = vmatprep.subr.bf16.mxu0 0
    %649 = vmatpush1.bf16.msra.mxu0 0
    %650 = vmatprep.subr.bf16.mxu0 0
    %651 = vmatpush1.bf16.msra.mxu0 0
    %652 = vmatprep.subr.bf16.mxu0 0
    %653 = vmatpush1.bf16.msra.mxu0 0
    %654 = vmatprep.subr.bf16.mxu0 0
    %655 = vmatpush1.bf16.msra.mxu0 0
    %656 = vmatprep.subr.bf16.mxu0 0
    %657 = vmatpush1.bf16.msra.mxu0 0
    %658 = vmatprep.subr.bf16.mxu0 0
    %659 = vmatpush1.bf16.msra.mxu0 0
    %660 = vmatprep.subr.bf16.mxu0 0
    %661 = vmatpush1.bf16.msra.mxu0 0
    %662 = vmatprep.subr.bf16.mxu0 0
    %663 = vmatpush1.bf16.msra.mxu0 0
    %664 = vmatprep.mubr.bf16.mxu0 0
    %665 = vmatmul.mubr.bf16.gmra.mrb[0].mxu0 %v630
    %v666 = vpop.f32.mrb[0].mxu0
    %v667 = vadd.f32 0.0, %v666
    %v668 = vpop.f32.mrb[0].mxu0
    %v669 = vpop.f32.mrb[0].mxu0
    %v670 = vadd.f32 0.0, %v669
    %v671 = vpop.f32.mrb[0].mxu0
    %672 = vdwg.mxu0
    %v673 = vpack.c.bf16 %v670, %v667
    %675 = vrot.lane.b32.xlu0 %v501, 96
    %v676 = vpop.permute.xlu0 %675
    %678 = vmatprep.subr.bf16.mxu0 0
    %679 = vmatpush1.bf16.msra.mxu0 %v673
    %680 = vmatprep.subr.bf16.mxu0 0
    %681 = vmatpush1.bf16.msra.mxu0 0
    %682 = vmatprep.subr.bf16.mxu0 0
    %683 = vmatpush1.bf16.msra.mxu0 0
    %684 = vmatprep.subr.bf16.mxu0 0
    %685 = vmatpush1.bf16.msra.mxu0 0
    %686 = vmatprep.subr.bf16.mxu0 0
    %687 = vmatpush1.bf16.msra.mxu0 0
    %688 = vmatprep.subr.bf16.mxu0 0
    %689 = vmatpush1.bf16.msra.mxu0 0
    %690 = vmatprep.subr.bf16.mxu0 0
    %691 = vmatpush1.bf16.msra.mxu0 0
    %692 = vmatprep.subr.bf16.mxu0 0
    %693 = vmatpush1.bf16.msra.mxu0 0
    %694 = vmatprep.subr.bf16.mxu0 0
    %695 = vmatpush1.bf16.msra.mxu0 0
    %696 = vmatprep.subr.bf16.mxu0 0
    %697 = vmatpush1.bf16.msra.mxu0 0
    %698 = vmatprep.subr.bf16.mxu0 0
    %699 = vmatpush1.bf16.msra.mxu0 0
    %700 = vmatprep.subr.bf16.mxu0 0
    %701 = vmatpush1.bf16.msra.mxu0 0
    %702 = vmatprep.subr.bf16.mxu0 0
    %703 = vmatpush1.bf16.msra.mxu0 0
    %704 = vmatprep.subr.bf16.mxu0 0
    %705 = vmatpush1.bf16.msra.mxu0 0
    %706 = vmatprep.subr.bf16.mxu0 0
    %707 = vmatpush1.bf16.msra.mxu0 0
    %708 = vmatprep.subr.bf16.mxu0 0
    %709 = vmatpush1.bf16.msra.mxu0 0
    %710 = vmatprep.mubr.bf16.mxu0 0
    %711 = vmatmul.mubr.bf16.gmra.mrb[0].mxu0 %v115
    %v712 = vpop.f32.mrb[0].mxu0
    %v713 = vadd.f32 %v676, %v712
    %v714 = vpop.f32.mrb[0].mxu0
    %v715 = vpop.f32.mrb[0].mxu0
    %v716 = vadd.f32 %v676, %v715
    %v717 = vpop.f32.mrb[0].mxu0
    %718 = vdwg.mxu0
    %v719 = vmax.f32 %v713, 0.0
    %v720 = vmax.f32 %v716, 0.0
    %v721 = vld [vmem:[%s1 + $0x4] sm:$0xff]
    %v722 = vld [vmem:[%s1 + $0x10] sm:$0xff]
    %v723 = vld [vmem:[%s1 + $0x1c] sm:$0xff]
    %v724 = vld [vmem:[%s1 + $0x28] sm:$0xff]
    %v725 = vld [vmem:[#allocation2 + $0x8] ss:$0 sm:$0xff]
    %v726 = vpack.c.bf16 %v720, %v719
    %v731 = vunpack.c.l.b16 %v721
    %v732 = vunpack.c.h.b16 %v721
    %v733 = vunpack.c.l.b16 %v722
    %v734 = vunpack.c.h.b16 %v722
    %v735 = vunpack.c.l.b16 %v723
    %v736 = vunpack.c.h.b16 %v723
    %v737 = vunpack.c.l.b16 %v724
    %v738 = vunpack.c.h.b16 %v724
    %v739 = vpack.c.b16 %v733, %v731
    %v740 = vpack.c.b16 %v734, %v732
    %v741 = vpack.c.b16 %v737, %v735
    %v742 = vpack.c.b16 %v738, %v736
    %743 = vrot.lane.b32.xlu0 %v739, 64
    %v744 = vpop.permute.xlu0 %743
    %745 = vrot.lane.b32.xlu0 %v740, 64
    %v746 = vpop.permute.xlu0 %745
    %747 = vrot.lane.b32.xlu0 %v741, 64
    %v748 = vpop.permute.xlu0 %747
    %749 = vrot.lane.b32.xlu0 %v742, 64
    %v750 = vpop.permute.xlu0 %749
    %vm751 = vcmask 523264
    %v752 = vsel %vm751, %v744, %v746
    %v753 = vsel %vm751, %v748, %v750
    %v757 = vsel %vm63, %v726, 0
    %759 = vmatprep.subr.bf16.mxu0 0
    %760 = vmatpush1.bf16.msra.mxu0 %v752
    %761 = vmatprep.subr.bf16.mxu0 0
    %762 = vmatpush1.bf16.msra.mxu0 %v753
    %763 = vmatprep.subr.bf16.mxu0 0
    %764 = vmatpush1.bf16.msra.mxu0 0
    %765 = vmatprep.subr.bf16.mxu0 0
    %766 = vmatpush1.bf16.msra.mxu0 0
    %767 = vmatprep.subr.bf16.mxu0 0
    %768 = vmatpush1.bf16.msra.mxu0 0
    %769 = vmatprep.subr.bf16.mxu0 0
    %770 = vmatpush1.bf16.msra.mxu0 0
    %771 = vmatprep.subr.bf16.mxu0 0
    %772 = vmatpush1.bf16.msra.mxu0 0
    %773 = vmatprep.subr.bf16.mxu0 0
    %774 = vmatpush1.bf16.msra.mxu0 0
    %775 = vmatprep.subr.bf16.mxu0 0
    %776 = vmatpush1.bf16.msra.mxu0 0
    %777 = vmatprep.subr.bf16.mxu0 0
    %778 = vmatpush1.bf16.msra.mxu0 0
    %779 = vmatprep.subr.bf16.mxu0 0
    %780 = vmatpush1.bf16.msra.mxu0 0
    %781 = vmatprep.subr.bf16.mxu0 0
    %782 = vmatpush1.bf16.msra.mxu0 0
    %783 = vmatprep.subr.bf16.mxu0 0
    %784 = vmatpush1.bf16.msra.mxu0 0
    %785 = vmatprep.subr.bf16.mxu0 0
    %786 = vmatpush1.bf16.msra.mxu0 0
    %787 = vmatprep.subr.bf16.mxu0 0
    %788 = vmatpush1.bf16.msra.mxu0 0
    %789 = vmatprep.subr.bf16.mxu0 0
    %790 = vmatpush1.bf16.msra.mxu0 0
    %791 = vmatprep.mubr.bf16.mxu0 0
    %792 = vmatmul.mubr.bf16.gmra.mrb[0].mxu0 %v757
    %v793 = vpop.f32.mrb[0].mxu0
    %v794 = vadd.f32 0.0, %v793
    %v795 = vpop.f32.mrb[0].mxu0
    %v796 = vpop.f32.mrb[0].mxu0
    %v797 = vadd.f32 0.0, %v796
    %v798 = vpop.f32.mrb[0].mxu0
    %799 = vdwg.mxu0
    %v800 = vpack.c.bf16 %v797, %v794
    %802 = vrot.lane.b32.xlu0 %v725, 64
    %v803 = vpop.permute.xlu0 %802
    %vm804 = vcmask 523264
    %v805 = vsel %vm804, %v803, %v111
    %807 = vmatprep.subr.bf16.mxu0 0
    %808 = vmatpush1.bf16.msra.mxu0 %v800
    %809 = vmatprep.subr.bf16.mxu0 0
    %810 = vmatpush1.bf16.msra.mxu0 0
    %811 = vmatprep.subr.bf16.mxu0 0
    %812 = vmatpush1.bf16.msra.mxu0 0
    %813 = vmatprep.subr.bf16.mxu0 0
    %814 = vmatpush1.bf16.msra.mxu0 0
    %815 = vmatprep.subr.bf16.mxu0 0
    %816 = vmatpush1.bf16.msra.mxu0 0
    %817 = vmatprep.subr.bf16.mxu0 0
    %818 = vmatpush1.bf16.msra.mxu0 0
    %819 = vmatprep.subr.bf16.mxu0 0
    %820 = vmatpush1.bf16.msra.mxu0 0
    %821 = vmatprep.subr.bf16.mxu0 0
    %822 = vmatpush1.bf16.msra.mxu0 0
    %823 = vmatprep.subr.bf16.mxu0 0
    %824 = vmatpush1.bf16.msra.mxu0 0
    %825 = vmatprep.subr.bf16.mxu0 0
    %826 = vmatpush1.bf16.msra.mxu0 0
    %827 = vmatprep.subr.bf16.mxu0 0
    %828 = vmatpush1.bf16.msra.mxu0 0
    %829 = vmatprep.subr.bf16.mxu0 0
    %830 = vmatpush1.bf16.msra.mxu0 0
    %831 = vmatprep.subr.bf16.mxu0 0
    %832 = vmatpush1.bf16.msra.mxu0 0
    %833 = vmatprep.subr.bf16.mxu0 0
    %834 = vmatpush1.bf16.msra.mxu0 0
    %835 = vmatprep.subr.bf16.mxu0 0
    %836 = vmatpush1.bf16.msra.mxu0 0
    %837 = vmatprep.subr.bf16.mxu0 0
    %838 = vmatpush1.bf16.msra.mxu0 0
    %839 = vmatprep.mubr.bf16.mxu0 0
    %840 = vmatmul.mubr.bf16.gmra.mrb[0].mxu0 %v115
    %v841 = vpop.f32.mrb[0].mxu0
    %v842 = vadd.f32 %v805, %v841
    %v843 = vpop.f32.mrb[0].mxu0
    %v844 = vpop.f32.mrb[0].mxu0
    %v845 = vadd.f32 %v805, %v844
    %v846 = vpop.f32.mrb[0].mxu0
    %847 = vdwg.mxu0
    %848 = vst [vmem:[#allocation5] sm:$0xff] %v842
    %849 = vst [vmem:[#allocation5 + $0x8] sm:$0xff] %v845
    // Predicated region
    $region22: #{gmt_recon_forward.1} parent=1 // pred_check
      _
    $region23: #{gmt_recon_forward.1} parent=1 // pred_check_branch
      %851 = sbr.rel (0) target = $region25
    $region24: #{gmt_recon_forward.1} parent=1 // pred_region
      %s853 = ssub.s32 256, 256
      %854 = vsyncadd [#allocation4], %s853
      %s855 = sshll.u32 [#allocation5], 4
      %s856 = int_to_ptr.vmem [resolvable:$true] %s855
      %861 = dma.vmem_to_hbm [thread:$0]  %s856, 256, %s4, [#allocation4], 128, 128, 8
    $region25: #{gmt_recon_forward.1} parent=1 // pred_fallthru
      _
    // Predicated region
    $region26: #{gmt_recon_forward.1} parent=1 // pred_check
      _
    $region27: #{gmt_recon_forward.1} parent=1 // pred_check_branch
      %863 = sbr.rel (0) target = $region29
    $region28: #{gmt_recon_forward.1} parent=1 // pred_region
      %864 = dma.done [#allocation4], 256
    $region29: #{gmt_recon_forward.1} parent=1 // pred_fallthru
      _
    %865 = vsyncpa [#allocation3], 1
    %866 = vsyncpa [#allocation4], 1

</llo_original>
